<compile_context>
chip_gen: v7x
topology: tpu7x:2x2x1
jax: 0.10.0
libtpu: 0.0.40
codegen_flags: <defaults>
</compile_context>

<pallas_src>
import functools

import jax
import jax.numpy as jnp
from jax.experimental import pallas as pl
from jax.experimental.pallas import tpu as pltpu


def _round_up(x, m):
    return ((x + m - 1) // m) * m


@functools.lru_cache(maxsize=None)
def _usable_vmem_bytes():
    """~85% of the chip's per-core VMEM; conservative 64 MiB fallback (v7x-safe)."""
    cap = 64 * 1024 * 1024
    try:
        cap = int(pltpu.get_tpu_info().vmem_capacity_bytes)
    except Exception:
        pass
    return int(cap * 0.85)


def _ssa_kernel(x_ref, w1t_ref, b1_ref, w2t_ref, b2_ref, o_ref, g_acc):
    """Grid = (row tiles i, hidden tiles j).

    Per (i, j):  h_j = relu(x_i @ W1^T[:, j] + b1[j])      (tm, tn)
                 g_acc += h_j @ W2^T[j, :]                  (tm, Fp) f32
    At j == last: o_i = x_i * sigmoid(g_acc + b2).
    Exact because ReLU/bias are elementwise along the hidden dim.
    """
    j = pl.program_id(1)

    @pl.when(j == 0)
    def _():
        g_acc[...] = jnp.zeros_like(g_acc)

    # First Linear (+ bias) and ReLU.  Feed the MXU directly from x_ref cast to the
    # weight dtype (bf16 path on v6e/v7x); accumulate in f32.
    h = jnp.dot(x_ref[...].astype(w1t_ref.dtype), w1t_ref[...],
                preferred_element_type=jnp.float32) + b1_ref[...]
    h = jnp.maximum(h, 0.0)

    # Second Linear partial sum over this hidden tile.
    g_acc[...] += jnp.dot(h.astype(w2t_ref.dtype), w2t_ref[...],
                          preferred_element_type=jnp.float32)

    @pl.when(j == pl.num_programs(1) - 1)
    def _():
        g = g_acc[...] + b2_ref[...]
        o_ref[...] = (x_ref[...].astype(jnp.float32) * jax.nn.sigmoid(g)
                      ).astype(o_ref.dtype)


def prepare_ssa_params(w1, b1, w2, b2, *, weights_dtype=jnp.bfloat16):
    """One-time (outside the hot path) weight prep.

    Takes PyTorch-layout weights (out, in) and biases (F,); returns pre-transposed
    (in, out) weights and row-vector biases, zero-padded so the feature dim is
    lane-aligned.  Zero padding is mathematically transparent (padded x columns,
    weight rows/cols and bias entries are all 0, so padded output columns are 0).
    """
    F = w1.shape[0]
    if F % 128 == 0:
        Fp = F                                   # already lane-aligned: no padding pass
    elif F >= 256:
        Fp = _round_up(F, 256)                   # fill v6e/v7x 2x256 MXU passes
    else:
        Fp = _round_up(F, 128)

    def pad_wt(w):
        wt = jnp.zeros((Fp, Fp), weights_dtype)
        return wt.at[:F, :F].set(w.T.astype(weights_dtype))

    def pad_b(b):
        br = jnp.zeros((1, Fp), jnp.float32)
        return br.at[0, :F].set(b.astype(jnp.float32))

    return pad_wt(w1), pad_b(b1), pad_wt(w2), pad_b(b2)


@jax.jit
def single_shot_attention(x, w1t_p, b1_p, w2t_p, b2_p):
    """x: (M, F).  w*t_p / b*_p: outputs of prepare_ssa_params (padded, transposed)."""
    M, F = x.shape
    Fp = w1t_p.shape[0]
    w_item = jnp.dtype(w1t_p.dtype).itemsize
    x_item = jnp.dtype(x.dtype).itemsize
    vmem_cap = _usable_vmem_bytes()

    # ---- Row tile tm ----
    # Big tiles in the small-F streaming regime; split rows so there are >= 2 grid
    # steps whenever M > 8 (both v7x TensorCores get work via "parallel").
    if Fp <= 512:
        tm_cap = 1024
    elif Fp <= 1024:
        tm_cap = 512
    else:
        tm_cap = 256
    tm = min(tm_cap, max(8, _round_up(-(-M // 2), 8)), _round_up(M, 8))

    def vmem_needed(tm_, tn_):
        # Honest accounting: Pallas double-buffers every in/out BlockSpec (even the
        # grid-invariant ones), plus the f32 scratch accumulator and in-kernel f32
        # temporaries h and g.
        weights = 2 * (Fp * tn_ + tn_ * Fp) * w_item
        biases = 2 * (tn_ + Fp) * 4
        xio = 2 * (tm_ * Fp * x_item) * 2          # x tile + out tile, double-buffered
        g_scratch = tm_ * Fp * 4
        temps = tm_ * tn_ * 4 + tm_ * Fp * 4
        return weights + biases + xio + g_scratch + temps

    # ---- Hidden tile tn ----
    # Largest 128-multiple divisor of Fp that fits the VMEM budget (tn == Fp keeps
    # weights fully resident; smaller tn streams them and removes the F ceiling).
    tn_candidates = [Fp] + [k * 128 for k in (32, 16, 8, 4, 2, 1)
                            if k * 128 < Fp and Fp % (k * 128) == 0]
    tn = 128
    for cand in tn_candidates:
        if vmem_needed(tm, cand) <= vmem_cap:
            tn = cand
            break
    while tm > 8 and vmem_needed(tm, tn) > vmem_cap:
        tm = _round_up(tm // 2, 8)

    n_i = -(-M // tm)          # cdiv: partial last row block handled by Pallas masking
    n_j = Fp // tn

    # Only materialize a padded copy of x when the feature dim needs lane padding.
    x_in = x if Fp == F else jnp.pad(x, ((0, 0), (0, Fp - F)))

    out = pl.pallas_call(
        _ssa_kernel,
        out_shape=jax.ShapeDtypeStruct((M, Fp), x.dtype),
        grid_spec=pltpu.PrefetchScalarGridSpec(
            num_scalar_prefetch=0,
            grid=(n_i, n_j),
            in_specs=[
                pl.BlockSpec((tm, Fp), lambda i, j: (i, 0)),   # x row tile (lane-dense)
                pl.BlockSpec((Fp, tn), lambda i, j: (0, j)),   # W1^T hidden-column tile
                pl.BlockSpec((1, tn), lambda i, j: (0, j)),    # b1 tile
                pl.BlockSpec((tn, Fp), lambda i, j: (j, 0)),   # W2^T hidden-row tile
                pl.BlockSpec((1, Fp), lambda i, j: (0, 0)),    # b2 (resident)
            ],
            out_specs=pl.BlockSpec((tm, Fp), lambda i, j: (i, 0)),
            scratch_shapes=[pltpu.VMEM((tm, Fp), jnp.float32)],   # gate-logit accumulator
        ),
        compiler_params=pltpu.CompilerParams(
            dimension_semantics=("parallel", "arbitrary"),
            vmem_limit_bytes=vmem_cap,
        ),
    )(x_in, w1t_p, b1_p, w2t_p, b2_p)

    return out if Fp == F else out[:, :F]


def _reference(x, w1, b1, w2, b2):
    h = jnp.maximum(x @ w1.T + b1, 0.0)
    g = h @ w2.T + b2
    return x * jax.nn.sigmoid(g)


if __name__ == "__main__":
    key = jax.random.PRNGKey(0)
    M, F = 16, 32                   # batch=16, in_features=32  (layers=2)
    kx, k1, k2, k3, k4 = jax.random.split(key, 5)

    x = jax.random.normal(kx, (M, F), dtype=jnp.float32)
    # Deterministic synthetic parameters (shapes match nn.Linear(F, F)).
    scale = 1.0 / jnp.sqrt(F)
    w1 = jax.random.uniform(k1, (F, F), jnp.float32, -scale, scale)
    b1 = jax.random.uniform(k2, (F,), jnp.float32, -scale, scale)
    w2 = jax.random.uniform(k3, (F, F), jnp.float32, -scale, scale)
    b2 = jax.random.uniform(k4, (F,), jnp.float32, -scale, scale)

    ref = _reference(x, w1, b1, w2, b2)

    # f32 weights: tight check against the reference.
    p_f32 = prepare_ssa_params(w1, b1, w2, b2, weights_dtype=jnp.float32)
    out_f32 = jax.block_until_ready(single_shot_attention(x, *p_f32))
    assert out_f32.shape == (M, F)
    assert jnp.allclose(out_f32, ref, atol=1e-5, rtol=1e-5)

    # bf16 weights (default; recommended on v6e/v7x): expected small drift vs f32.
    p_bf16 = prepare_ssa_params(w1, b1, w2, b2)
    out_bf16 = jax.block_until_ready(single_shot_attention(x, *p_bf16))
    assert out_bf16.shape == (M, F)
    assert jnp.allclose(out_bf16, ref, atol=3e-2, rtol=3e-2)

    print("KERNEL_OK")
</pallas_src>

<mosaic_0001>
module attributes {stable_mosaic.version = 11 : i64} {
  func.func @_ssa_kernel(%arg0: i32, %arg1: i32, %arg2: memref<8x128xf32, #tpu.memory_space<vmem>>, %arg3: memref<128x128xf32, #tpu.memory_space<vmem>>, %arg4: memref<1x128xf32, #tpu.memory_space<vmem>>, %arg5: memref<128x128xf32, #tpu.memory_space<vmem>>, %arg6: memref<1x128xf32, #tpu.memory_space<vmem>>, %arg7: memref<8x128xf32, #tpu.memory_space<vmem>>, %arg8: memref<8x128xf32, #tpu.memory_space<vmem>>) attributes {dimension_semantics = [#tpu.dimension_semantics<parallel>, #tpu.dimension_semantics<arbitrary>], iteration_bounds = array<i64: 2, 1>, scalar_prefetch = 0 : i64, scratch_operands = 1 : i64, tpu.core_type = #tpu.core_type<tc>, window_params = [{transform_indices = @transform_0, window_bounds = array<i64: 8, 128>}, {transform_indices = @transform_1, window_bounds = array<i64: 128, 128>}, {transform_indices = @transform_2, window_bounds = array<i64: 1, 128>}, {transform_indices = @transform_3, window_bounds = array<i64: 128, 128>}, {pipeline_mode = #tpu.pipeline_mode<synchronous>, transform_indices = @transform_4, window_bounds = array<i64: 1, 128>}, {transform_indices = @transform_5, window_bounds = array<i64: 8, 128>}]} {
    %c0_i32 = arith.constant 0 : i32
    %0 = arith.cmpi eq, %arg1, %c0_i32 : i32
    %1 = arith.extui %0 : i1 to i32
    %c0_i32_0 = arith.constant 0 : i32
    %2 = arith.cmpi ne, %1, %c0_i32_0 : i32
    scf.if %2 {
      %cst_16 = arith.constant 0.000000e+00 : f32
      %19 = vector.broadcast %cst_16 : f32 to vector<8x128xf32>
      %c0_17 = arith.constant 0 : index
      %c0_18 = arith.constant 0 : index
      %20 = vector.load %arg8[%c0_17, %c0_18] : memref<8x128xf32, #tpu.memory_space<vmem>>, vector<8x128xf32>
      tpu.vector_store %arg8[%c0_17, %c0_18], %19 {strides = array<i32>} : memref<8x128xf32, #tpu.memory_space<vmem>>, vector<8x128xf32>,
    } else {
    }
    %c0 = arith.constant 0 : index
    %c0_1 = arith.constant 0 : index
    %3 = vector.load %arg2[%c0, %c0_1] : memref<8x128xf32, #tpu.memory_space<vmem>>, vector<8x128xf32>
    %c0_2 = arith.constant 0 : index
    %c0_3 = arith.constant 0 : index
    %4 = vector.load %arg3[%c0_2, %c0_3] : memref<128x128xf32, #tpu.memory_space<vmem>>, vector<128x128xf32>
    %cst = arith.constant dense<0.000000e+00> : vector<8x128xf32>
    %5 = tpu.matmul %3, %4, %cst {dimension_numbers = #tpu.dot_dimension_numbers<[1], [0], [0], [1], [0, 0, 1, 1], [], []>} : vector<8x128xf32>, vector<128x128xf32>, vector<8x128xf32> -> vector<8x128xf32>
    %c0_4 = arith.constant 0 : index
    %c0_5 = arith.constant 0 : index
    %6 = vector.load %arg4[%c0_4, %c0_5] : memref<1x128xf32, #tpu.memory_space<vmem>>, vector<1x128xf32>
    %7 = vector.broadcast %6 : vector<1x128xf32> to vector<8x128xf32>
    %8 = arith.addf %5, %7 : vector<8x128xf32>
    %cst_6 = arith.constant 0.000000e+00 : f32
    %9 = vector.broadcast %cst_6 : f32 to vector<8x128xf32>
    %10 = arith.maximumf %8, %9 : vector<8x128xf32>
    %c0_7 = arith.constant 0 : index
    %c0_8 = arith.constant 0 : index
    %11 = vector.load %arg8[%c0_7, %c0_8] : memref<8x128xf32, #tpu.memory_space<vmem>>, vector<8x128xf32>
    %c0_9 = arith.constant 0 : index
    %c0_10 = arith.constant 0 : index
    %12 = vector.load %arg5[%c0_9, %c0_10] : memref<128x128xf32, #tpu.memory_space<vmem>>, vector<128x128xf32>
    %cst_11 = arith.constant dense<0.000000e+00> : vector<8x128xf32>
    %13 = tpu.matmul %10, %12, %cst_11 {dimension_numbers = #tpu.dot_dimension_numbers<[1], [0], [0], [1], [0, 0, 1, 1], [], []>} : vector<8x128xf32>, vector<128x128xf32>, vector<8x128xf32> -> vector<8x128xf32>
    %14 = arith.addf %11, %13 : vector<8x128xf32>
    %c0_12 = arith.constant 0 : index
    %c0_13 = arith.constant 0 : index
    %15 = vector.load %arg8[%c0_12, %c0_13] : memref<8x128xf32, #tpu.memory_space<vmem>>, vector<8x128xf32>
    tpu.vector_store %arg8[%c0_12, %c0_13], %14 {strides = array<i32>} : memref<8x128xf32, #tpu.memory_space<vmem>>, vector<8x128xf32>,
    %c0_i32_14 = arith.constant 0 : i32
    %16 = arith.cmpi eq, %arg1, %c0_i32_14 : i32
    %17 = arith.extui %16 : i1 to i32
    %c0_i32_15 = arith.constant 0 : i32
    %18 = arith.cmpi ne, %17, %c0_i32_15 : i32
    scf.if %18 {
      %c0_16 = arith.constant 0 : index
      %c0_17 = arith.constant 0 : index
      %19 = vector.load %arg8[%c0_16, %c0_17] : memref<8x128xf32, #tpu.memory_space<vmem>>, vector<8x128xf32>
      %c0_18 = arith.constant 0 : index
      %c0_19 = arith.constant 0 : index
      %20 = vector.load %arg6[%c0_18, %c0_19] : memref<1x128xf32, #tpu.memory_space<vmem>>, vector<1x128xf32>
      %21 = vector.broadcast %20 : vector<1x128xf32> to vector<8x128xf32>
      %22 = arith.addf %19, %21 : vector<8x128xf32>
      %c0_20 = arith.constant 0 : index
      %c0_21 = arith.constant 0 : index
      %23 = vector.load %arg2[%c0_20, %c0_21] : memref<8x128xf32, #tpu.memory_space<vmem>>, vector<8x128xf32>
      %24 = arith.negf %22 : vector<8x128xf32>
      %25 = math.exp %24 : vector<8x128xf32>
      %cst_22 = arith.constant 1.000000e+00 : f32
      %26 = vector.broadcast %cst_22 : f32 to vector<8x128xf32>
      %27 = arith.addf %26, %25 : vector<8x128xf32>
      %28 = arith.divf %26, %27 : vector<8x128xf32>
      %29 = arith.mulf %23, %28 : vector<8x128xf32>
      %c0_23 = arith.constant 0 : index
      %c0_24 = arith.constant 0 : index
      %30 = vector.load %arg7[%c0_23, %c0_24] : memref<8x128xf32, #tpu.memory_space<vmem>>, vector<8x128xf32>
      tpu.vector_store %arg7[%c0_23, %c0_24], %29 {strides = array<i32>} : memref<8x128xf32, #tpu.memory_space<vmem>>, vector<8x128xf32>,
    } else {
    }
    return
  }
  func.func @transform_0(%arg0: i32, %arg1: i32) -> (i32, i32) {
    %c0_i32 = arith.constant 0 : i32
    %c0_i32_0 = arith.constant 0 : i32
    return %arg0, %c0_i32 : i32, i32
  }
  func.func @transform_1(%arg0: i32, %arg1: i32) -> (i32, i32) {
    %c0_i32 = arith.constant 0 : i32
    %c0_i32_0 = arith.constant 0 : i32
    return %c0_i32, %arg1 : i32, i32
  }
  func.func @transform_2(%arg0: i32, %arg1: i32) -> (i32, i32) {
    %c0_i32 = arith.constant 0 : i32
    %c0_i32_0 = arith.constant 0 : i32
    return %c0_i32, %arg1 : i32, i32
  }
  func.func @transform_3(%arg0: i32, %arg1: i32) -> (i32, i32) {
    %c0_i32 = arith.constant 0 : i32
    %c0_i32_0 = arith.constant 0 : i32
    return %arg1, %c0_i32 : i32, i32
  }
  func.func @transform_4(%arg0: i32, %arg1: i32) -> (i32, i32) {
    %c0_i32 = arith.constant 0 : i32
    %c0_i32_0 = arith.constant 0 : i32
    %c0_i32_1 = arith.constant 0 : i32
    return %c0_i32, %c0_i32_0 : i32, i32
  }
  func.func @transform_5(%arg0: i32, %arg1: i32) -> (i32, i32) {
    %c0_i32 = arith.constant 0 : i32
    %c0_i32_0 = arith.constant 0 : i32
    return %arg0, %c0_i32 : i32, i32
  }
}

</mosaic_0001>

<llo_original>
// kernel: single_shot_attention.1
$region0: #{single_shot_attention.1}
  #allocation0 [shape = 'u32[]', space=smem, size = 0x4, offset = 0x4, fixed_abs, tag = 'smem constant byte address 0x4 - core index']
  #allocation1 [shape = 'u32[144,128]{1,0:T(1,128)}', space=vmem, size = 0x12000, scoped, tag = 'internal scratch']
  #allocation2 [shape = 'f32[8,128]{1,0:T(8,128)}', space=vmem, size = 0x1000, scoped, tag = 'scratch operand']
  %s0 = inlined_call_operand.vmem [shape: f32[16,128], index: 0, kind: input, shape index: {}]
  %s1 = inlined_call_operand.hbm [shape: f32[128,128], index: 1, kind: input, shape index: {}]
  %s2 = inlined_call_operand.vmem [shape: f32[1,128], index: 2, kind: input, shape index: {}]
  %s3 = inlined_call_operand.hbm [shape: f32[128,128], index: 3, kind: input, shape index: {}]
  %s4 = inlined_call_operand.vmem [shape: f32[1,128], index: 4, kind: input, shape index: {}]
  %s5 = inlined_call_operand.hbm [shape: f32[16,128], index: 5, kind: output, shape index: {}]
  %s6 = sld [smem:[#allocation0]]
  $region69: #{single_shot_attention.1} parent=0
    _
  %s8 = ssub.s32 1, %s6
  %s9 = scalar_select 0, %s8, %s6
  $region1: #{single_shot_attention.1} parent=0
    #allocation3 [shape = 'u8[65536]{0}', space=vmem, size = 0x10000, scoped, tag = 'input window, operand 1, single buffered']
    #allocation4 [shape = 's32[2]{0}', space=sflag, size = 0x8, scoped, tag = 'scoped memory for single_shot_attention.1']
    #allocation5 [shape = 's32[2]{0}', space=sflag, size = 0x8, scoped, tag = 'scoped memory for single_shot_attention.1']
    #allocation6 [shape = 'u8[65536]{0}', space=vmem, size = 0x10000, scoped, tag = 'input window, operand 3, single buffered']
    #allocation7 [shape = 's32[1]{0}', space=sflag, size = 0x4, scoped, tag = 'scoped memory for single_shot_attention.1']
    #allocation8 [shape = 'u8[8192]{0}', space=vmem, size = 0x2000, scoped, tag = 'output window, operand 0']
    %10 = vsyncpa [#allocation4], 0
    %11 = vsyncpa [#allocation7], 0
    %12 = vsyncpa [#allocation5], 0
    %s13 = scalar_lea.sflag [#allocation5], 1
    %14 = vsyncpa %s13, 0
    loop: start=0, step=1, limit=4
    $region2: #{single_shot_attention.1} parent=1 // loop_pre_header
      _
    $region3: #{single_shot_attention.1} parent=1 // loop_header
      %s16 = sphi 0, %s20
      %p17 = scmp.ge.s32.totalorder %s16, 4
      %s23 = sphi 0, %s35
      %s24 = sphi 0, %s31
      %s25 = sphi 0, %s23
      %s26 = sphi 0, %s24
      %s27 = sphi 0, %s25
      %s28 = sphi 0, %s26
      %s38 = sphi 0, %s40
      %s41 = sphi 0, %s38
      %s42 = sphi 0, %s41
      %s58 = sphi 0, %s42
      %s64 = sphi 0, %s66
      %s67 = sphi 0, %s64
      %s68 = sphi 0, %s67
      %s84 = sphi 0, %s68
      %s90 = sphi 0, %s92
      %s93 = sphi 0, %s90
      %s94 = sphi 0, %s93
      %s110 = sphi 0, %s94
      %s116 = sphi 0, %s118
      %s119 = sphi 0, %s116
      %s120 = sphi 0, %s119
      %s136 = sphi 0, %s120
      %s140 = sphi 0, %s140
      %s142 = sphi 0, %s140
      %s143 = sphi 0, %s142
      %s157 = sphi 0, %s143
      %s163 = sphi 0, %s165
      %s166 = sphi 0, %s163
      %s167 = sphi 0, %s166
      %s183 = sphi 0, %s167
    $region4: #{single_shot_attention.1} parent=1 // loop_header_branch
      %19 = sbr.rel (%p17) target = $region8
    $region5: #{single_shot_attention.1} parent=1 // loop_body
      %s21 = ssub.s32 %s16, 1
      %s22 = ssub.s32 %s16, 2
      %s29 = sadd.s32 1, %s24
      %p30 = scmp.ge.s32.totalorder %s29, 1
      %s31 = scalar_select %p30, 0, %s29
      %s32 = sadd.s32 1, %s23
      %s33 = scalar_select %p30, %s32, %s23
      %p34 = scmp.ge.s32.totalorder %s33, 2
      %s35 = scalar_select %p34, 0, %s33
      %s36 = ssub.s32 %s23, %s35
      %p37 = scmp.eq.s32.totalorder %s36, 0
      %s39 = sadd.s32 %s38, 1
      %s40 = scalar_select %p37, %s38, %s39
      %p43 = pneg %p37
      %p44 = scmp.eq.s32.totalorder %s16, 1
      %p45 = por %p43, %p44
      %p46 = scmp.ne.s32.totalorder %s38, %s41
      %p47 = scmp.eq.s32.totalorder %s16, 0
      %p48 = por %p46, %p47
      %p49 = scmp.ne.s32.totalorder %s38, %s41
      %p50 = scmp.eq.s32.totalorder %s21, 1
      %p51 = por %p49, %p50
      %p52 = scmp.ne.s32.totalorder %s41, %s42
      %p53 = scmp.eq.s32.totalorder %s21, 0
      %p54 = por %p52, %p53
      %p55 = scmp.ne.s32.totalorder %s41, %s42
      %p56 = scmp.eq.s32.totalorder %s22, 1
      %p57 = por %p55, %p56
      %p59 = scmp.ne.s32.totalorder %s42, %s58
      %p60 = scmp.eq.s32.totalorder %s22, 0
      %p61 = por %p59, %p60
      %s62 = ssub.s32 %s24, %s31
      %p63 = scmp.eq.s32.totalorder %s62, 0
      %s65 = sadd.s32 %s64, 1
      %s66 = scalar_select %p63, %s64, %s65
      %p69 = pneg %p63
      %p70 = scmp.eq.s32.totalorder %s16, 1
      %p71 = por %p69, %p70
      %p72 = scmp.ne.s32.totalorder %s64, %s67
      %p73 = scmp.eq.s32.totalorder %s16, 0
      %p74 = por %p72, %p73
      %p75 = scmp.ne.s32.totalorder %s64, %s67
      %p76 = scmp.eq.s32.totalorder %s21, 1
      %p77 = por %p75, %p76
      %p78 = scmp.ne.s32.totalorder %s67, %s68
      %p79 = scmp.eq.s32.totalorder %s21, 0
      %p80 = por %p78, %p79
      %p81 = scmp.ne.s32.totalorder %s67, %s68
      %p82 = scmp.eq.s32.totalorder %s22, 1
      %p83 = por %p81, %p82
      %p85 = scmp.ne.s32.totalorder %s68, %s84
      %p86 = scmp.eq.s32.totalorder %s22, 0
      %p87 = por %p85, %p86
      %s88 = ssub.s32 %s24, %s31
      %p89 = scmp.eq.s32.totalorder %s88, 0
      %s91 = sadd.s32 %s90, 1
      %s92 = scalar_select %p89, %s90, %s91
      %p95 = pneg %p89
      %p96 = scmp.eq.s32.totalorder %s16, 1
      %p97 = por %p95, %p96
      %p98 = scmp.ne.s32.totalorder %s90, %s93
      %p99 = scmp.eq.s32.totalorder %s16, 0
      %p100 = por %p98, %p99
      %p101 = scmp.ne.s32.totalorder %s90, %s93
      %p102 = scmp.eq.s32.totalorder %s21, 1
      %p103 = por %p101, %p102
      %p104 = scmp.ne.s32.totalorder %s93, %s94
      %p105 = scmp.eq.s32.totalorder %s21, 0
      %p106 = por %p104, %p105
      %p107 = scmp.ne.s32.totalorder %s93, %s94
      %p108 = scmp.eq.s32.totalorder %s22, 1
      %p109 = por %p107, %p108
      %p111 = scmp.ne.s32.totalorder %s94, %s110
      %p112 = scmp.eq.s32.totalorder %s22, 0
      %p113 = por %p111, %p112
      %s114 = ssub.s32 %s24, %s31
      %p115 = scmp.eq.s32.totalorder %s114, 0
      %s117 = sadd.s32 %s116, 1
      %s118 = scalar_select %p115, %s116, %s117
      %p121 = pneg %p115
      %p122 = scmp.eq.s32.totalorder %s16, 1
      %p123 = por %p121, %p122
      %p124 = scmp.ne.s32.totalorder %s116, %s119
      %p125 = scmp.eq.s32.totalorder %s16, 0
      %p126 = por %p124, %p125
      %p127 = scmp.ne.s32.totalorder %s116, %s119
      %p128 = scmp.eq.s32.totalorder %s21, 1
      %p129 = por %p127, %p128
      %p130 = scmp.ne.s32.totalorder %s119, %s120
      %p131 = scmp.eq.s32.totalorder %s21, 0
      %p132 = por %p130, %p131
      %p133 = scmp.ne.s32.totalorder %s119, %s120
      %p134 = scmp.eq.s32.totalorder %s22, 1
      %p135 = por %p133, %p134
      %p137 = scmp.ne.s32.totalorder %s120, %s136
      %p138 = scmp.eq.s32.totalorder %s22, 0
      %p139 = por %p137, %p138
      %s141 = sadd.s32 %s140, 1
      %p144 = scmp.eq.s32.totalorder %s16, 1
      %p145 = scmp.ne.s32.totalorder %s140, %s142
      %p146 = scmp.eq.s32.totalorder %s16, 0
      %p147 = por %p145, %p146
      %p148 = scmp.ne.s32.totalorder %s140, %s142
      %p149 = scmp.eq.s32.totalorder %s21, 1
      %p150 = por %p148, %p149
      %p151 = scmp.ne.s32.totalorder %s142, %s143
      %p152 = scmp.eq.s32.totalorder %s21, 0
      %p153 = por %p151, %p152
      %p154 = scmp.ne.s32.totalorder %s142, %s143
      %p155 = scmp.eq.s32.totalorder %s22, 1
      %p156 = por %p154, %p155
      %p158 = scmp.ne.s32.totalorder %s143, %s157
      %p159 = scmp.eq.s32.totalorder %s22, 0
      %p160 = por %p158, %p159
      %s161 = ssub.s32 %s23, %s35
      %p162 = scmp.eq.s32.totalorder %s161, 0
      %s164 = sadd.s32 %s163, 1
      %s165 = scalar_select %p162, %s163, %s164
      %p168 = pneg %p162
      %p169 = scmp.eq.s32.totalorder %s16, 1
      %p170 = por %p168, %p169
      %p171 = scmp.ne.s32.totalorder %s163, %s166
      %p172 = scmp.eq.s32.totalorder %s16, 0
      %p173 = por %p171, %p172
      %p174 = scmp.ne.s32.totalorder %s163, %s166
      %p175 = scmp.eq.s32.totalorder %s21, 1
      %p176 = por %p174, %p175
      %p177 = scmp.ne.s32.totalorder %s166, %s167
      %p178 = scmp.eq.s32.totalorder %s21, 0
      %p179 = por %p177, %p178
      %p180 = scmp.ne.s32.totalorder %s166, %s167
      %p181 = scmp.eq.s32.totalorder %s22, 1
      %p182 = por %p180, %p181
      %p184 = scmp.ne.s32.totalorder %s167, %s183
      %p185 = scmp.eq.s32.totalorder %s22, 0
      %p186 = por %p184, %p185
      %p187 = scmp.le.s32.totalorder 1, %s16
      %p188 = scmp.lt.s32.totalorder %s16, 3
      %p189 = pnand %p187, %p188
      %p190 = pneg %p189
      // Predicated region
      $region9: #{single_shot_attention.1} parent=5 // pred_check
        _
      $region10: #{single_shot_attention.1} parent=5 // pred_check_branch
        %192 = sbr.rel (%p189) target = $region12
      $region11: #{single_shot_attention.1} parent=5 // pred_region
        %s193 = ssub.s32 %s16, 1
        // Predicated region
        $region13: #{single_shot_attention.1} parent=11 // pred_check
          %p194 = pneg %p80
        $region14: #{single_shot_attention.1} parent=11 // pred_check_branch
          %196 = sbr.rel (%p194) target = $region16
        $region15: #{single_shot_attention.1} parent=11 // pred_region
          %s198 = ssub.s32 2048, 2048
          %199 = vsyncadd [#allocation4], %s198
          %s200 = smul.addr %s26, 128
          %s201 = scalar_lea.hbm %s1, %s200
          %s202 = sshll.u32 [#allocation3], 4
          %s203 = int_to_ptr.vmem [resolvable:$true] %s202
          %208 = dma.hbm_to_vmem [thread:$0]  %s201, 2048, %s203, [#allocation4], 128, 128, 8
        $region16: #{single_shot_attention.1} parent=11 // pred_fallthru
          _
        // Predicated region
        $region17: #{single_shot_attention.1} parent=11 // pred_check
          %p209 = pneg %p106
        $region18: #{single_shot_attention.1} parent=11 // pred_check_branch
          %211 = sbr.rel (%p209) target = $region20
        $region19: #{single_shot_attention.1} parent=11 // pred_region
          %p212 = scmp.lt.s32.totalorder %s26, 0
          %s213 = scalar_select %p212, %s26, 0
          %s214 = scalar_lea.vmem %s2, %s213
        $region20: #{single_shot_attention.1} parent=11 // pred_fallthru
          _
        // Predicated region
        $region21: #{single_shot_attention.1} parent=11 // pred_check
          %p215 = pneg %p132
        $region22: #{single_shot_attention.1} parent=11 // pred_check_branch
          %217 = sbr.rel (%p215) target = $region24
        $region23: #{single_shot_attention.1} parent=11 // pred_region
          %s218 = smul.u32 16, %s26
          %s220 = ssub.s32 2048, 2048
          %221 = vsyncadd [#allocation7], %s220
          %s222 = smul.addr %s218, 128
          %s223 = scalar_lea.hbm %s3, %s222
          %s224 = sshll.u32 [#allocation6], 4
          %s225 = int_to_ptr.vmem [resolvable:$true] %s224
          %230 = dma.hbm_to_vmem [thread:$0]  %s223, 2048, %s225, [#allocation7], 128, 128, 8
        $region24: #{single_shot_attention.1} parent=11 // pred_fallthru
          _
        // Predicated region
        $region25: #{single_shot_attention.1} parent=11 // pred_check
          %p231 = pneg %p153
        $region26: #{single_shot_attention.1} parent=11 // pred_check_branch
          %233 = sbr.rel (%p231) target = $region28
        $region27: #{single_shot_attention.1} parent=11 // pred_region
          _
        $region28: #{single_shot_attention.1} parent=11 // pred_fallthru
          _
      $region12: #{single_shot_attention.1} parent=5 // pred_fallthru
        _
      %p234 = scmp.lt.s32.totalorder %s16, 2
      // Predicated region
      $region29: #{single_shot_attention.1} parent=5 // pred_check
        %p235 = pneg %p234
      $region30: #{single_shot_attention.1} parent=5 // pred_check_branch
        %237 = sbr.rel (%p235) target = $region32
      $region31: #{single_shot_attention.1} parent=5 // pred_region
        // Predicated region
        $region33: #{single_shot_attention.1} parent=31 // pred_check
          %p238 = pneg %p48
        $region34: #{single_shot_attention.1} parent=31 // pred_check_branch
          %240 = sbr.rel (%p238) target = $region36
        $region35: #{single_shot_attention.1} parent=31 // pred_region
          %p241 = scmp.lt.s32.totalorder %s23, 1
          %s242 = scalar_select %p241, %s23, 1
          %s243 = smul.addr %s242, 8
          %s244 = scalar_lea.vmem %s0, %s243
        $region36: #{single_shot_attention.1} parent=31 // pred_fallthru
          _
      $region32: #{single_shot_attention.1} parent=5 // pred_fallthru
        _
      %p245 = scmp.le.s32.totalorder 1, %s16
      %p246 = scmp.lt.s32.totalorder %s16, 3
      %p247 = pnand %p245, %p246
      %p248 = pneg %p247
      // Predicated region
      $region37: #{single_shot_attention.1} parent=5 // pred_check
        _
      $region38: #{single_shot_attention.1} parent=5 // pred_check_branch
        %250 = sbr.rel (%p247) target = $region40
      $region39: #{single_shot_attention.1} parent=5 // pred_region
        %s251 = ssub.s32 %s16, 1
        // Predicated region
        $region41: #{single_shot_attention.1} parent=39 // pred_check
          %p252 = pneg %p80
        $region42: #{single_shot_attention.1} parent=39 // pred_check_branch
          %254 = sbr.rel (%p252) target = $region44
        $region43: #{single_shot_attention.1} parent=39 // pred_region
          %255 = dma.done [#allocation4], 2048
        $region44: #{single_shot_attention.1} parent=39 // pred_fallthru
          _
        // Predicated region
        $region45: #{single_shot_attention.1} parent=39 // pred_check
          %p256 = pneg %p132
        $region46: #{single_shot_attention.1} parent=39 // pred_check_branch
          %258 = sbr.rel (%p256) target = $region48
        $region47: #{single_shot_attention.1} parent=39 // pred_region
          %259 = dma.done [#allocation7], 2048
        $region48: #{single_shot_attention.1} parent=39 // pred_fallthru
          _
        %p260 = scmp.lt.s32.totalorder %s25, 1
        %s261 = scalar_select %p260, %s25, 1
        %s262 = smul.addr %s261, 8
        %s263 = scalar_lea.vmem %s0, %s262
        %p264 = pneg %p54
        %p265 = pneg %p51
        %p266 = pneg %p80
        %p267 = pneg %p77
        %p268 = scmp.lt.s32.totalorder %s26, 0
        %s269 = scalar_select %p268, %s26, 0
        %s270 = scalar_lea.vmem %s2, %s269
        %p271 = pneg %p106
        %p272 = pneg %p103
        %p273 = pneg %p132
        %p274 = pneg %p129
        %p275 = pneg %p153
        %p276 = pneg %p150
        %p277 = pneg %p179
        %p278 = pneg %p176
        %s279 = sand.u32 %s166, 1
        %s280 = scalar_lea.sflag [#allocation5], %s279
        %s281 = sand.u32 %s166, 1
        %s282 = smul.addr %s281, 8
        %s283 = scalar_lea.vmem [#allocation8], %s282
        %p284 = scmp.lt.s32.totalorder %s25, 1
        %s285 = scalar_select %p284, %s25, 1
        %s286 = smul.addr %s285, 8
        %s287 = scalar_lea.vmem %s0, %s286
        %p288 = scmp.lt.s32.totalorder %s26, 0
        %s289 = scalar_select %p288, %s26, 0
        %s290 = scalar_lea.vmem %s2, %s289
        %s291 = smul.u32 16, %s26
        %p292 = scmp.eq.s32.totalorder %s26, 0
        // Predicated region
        $region49: #{single_shot_attention.1} parent=39 // pred_check
          %p293 = pneg %p292
        $region50: #{single_shot_attention.1} parent=39 // pred_check_branch
          %295 = sbr.rel (%p293) target = $region52
        $region51: #{single_shot_attention.1} parent=39 // pred_region
          %296 = vst [vmem:[#allocation2] sm:$0xff] 0.0
        $region52: #{single_shot_attention.1} parent=39 // pred_fallthru
          _
        %v297 = vld [vmem:[%s287] sm:$0xff]
        %v298 = vld [vmem:[#allocation3] sm:$0xff]
        %v299 = vld [vmem:[#allocation3 + $0x8] sm:$0xff]
        %v300 = vld [vmem:[#allocation3 + $0x10] sm:$0xff]
        %v301 = vld [vmem:[#allocation3 + $0x18] sm:$0xff]
        %v302 = vld [vmem:[#allocation3 + $0x20] sm:$0xff]
        %v303 = vld [vmem:[#allocation3 + $0x28] sm:$0xff]
        %v304 = vld [vmem:[#allocation3 + $0x30] sm:$0xff]
        %v305 = vld [vmem:[#allocation3 + $0x38] sm:$0xff]
        %v306 = vld [vmem:[#allocation3 + $0x40] sm:$0xff]
        %v307 = vld [vmem:[#allocation3 + $0x48] sm:$0xff]
        %v308 = vld [vmem:[#allocation3 + $0x50] sm:$0xff]
        %v309 = vld [vmem:[#allocation3 + $0x58] sm:$0xff]
        %v310 = vld [vmem:[#allocation3 + $0x60] sm:$0xff]
        %v311 = vld [vmem:[#allocation3 + $0x68] sm:$0xff]
        %v312 = vld [vmem:[#allocation3 + $0x70] sm:$0xff]
        %v313 = vld [vmem:[#allocation3 + $0x78] sm:$0xff]
        %v314 = vld [vmem:[%s290] sm:$0x1]
        %v316 = vlaneseq
        %v317 = vshrl.u32 %v316, 7
        %v318 = vsub.s32 0, %v317
        %v319 = vrot.slane %v314, %v318
        %321 = vmatprep.subr.mxu0 0.0
        %322 = vmatpush1.msra.mxu0 %v298
        %323 = vmatprep.subr.mxu0 0.0
        %324 = vmatpush1.msra.mxu0 %v299
        %325 = vmatprep.subr.mxu0 0.0
        %326 = vmatpush1.msra.mxu0 %v300
        %327 = vmatprep.subr.mxu0 0.0
        %328 = vmatpush1.msra.mxu0 %v301
        %329 = vmatprep.subr.mxu0 0.0
        %330 = vmatpush1.msra.mxu0 %v302
        %331 = vmatprep.subr.mxu0 0.0
        %332 = vmatpush1.msra.mxu0 %v303
        %333 = vmatprep.subr.mxu0 0.0
        %334 = vmatpush1.msra.mxu0 %v304
        %335 = vmatprep.subr.mxu0 0.0
        %336 = vmatpush1.msra.mxu0 %v305
        %337 = vmatprep.subr.mxu0 0.0
        %338 = vmatpush1.msra.mxu0 %v306
        %339 = vmatprep.subr.mxu0 0.0
        %340 = vmatpush1.msra.mxu0 %v307
        %341 = vmatprep.subr.mxu0 0.0
        %342 = vmatpush1.msra.mxu0 %v308
        %343 = vmatprep.subr.mxu0 0.0
        %344 = vmatpush1.msra.mxu0 %v309
        %345 = vmatprep.subr.mxu0 0.0
        %346 = vmatpush1.msra.mxu0 %v310
        %347 = vmatprep.subr.mxu0 0.0
        %348 = vmatpush1.msra.mxu0 %v311
        %349 = vmatprep.subr.mxu0 0.0
        %350 = vmatpush1.msra.mxu0 %v312
        %351 = vmatprep.subr.mxu0 0.0
        %352 = vmatpush1.msra.mxu0 %v313
        %353 = vmatprep.subr.mxu0 0.0
        %354 = vmatpush1.msra.mxu0 0.0
        %355 = vmatprep.subr.mxu0 0.0
        %356 = vmatpush1.msra.mxu0 0.0
        %357 = vmatprep.subr.mxu0 0.0
        %358 = vmatpush1.msra.mxu0 0.0
        %359 = vmatprep.subr.mxu0 0.0
        %360 = vmatpush1.msra.mxu0 0.0
        %361 = vmatprep.subr.mxu0 0.0
        %362 = vmatpush1.msra.mxu0 0.0
        %363 = vmatprep.subr.mxu0 0.0
        %364 = vmatpush1.msra.mxu0 0.0
        %365 = vmatprep.subr.mxu0 0.0
        %366 = vmatpush1.msra.mxu0 0.0
        %367 = vmatprep.subr.mxu0 0.0
        %368 = vmatpush1.msra.mxu0 0.0
        %369 = vmatprep.subr.mxu0 0.0
        %370 = vmatpush1.msra.mxu0 0.0
        %371 = vmatprep.subr.mxu0 0.0
        %372 = vmatpush1.msra.mxu0 0.0
        %373 = vmatprep.subr.mxu0 0.0
        %374 = vmatpush1.msra.mxu0 0.0
        %375 = vmatprep.subr.mxu0 0.0
        %376 = vmatpush1.msra.mxu0 0.0
        %377 = vmatprep.subr.mxu0 0.0
        %378 = vmatpush1.msra.mxu0 0.0
        %379 = vmatprep.subr.mxu0 0.0
        %380 = vmatpush1.msra.mxu0 0.0
        %381 = vmatprep.subr.mxu0 0.0
        %382 = vmatpush1.msra.mxu0 0.0
        %383 = vmatprep.subr.mxu0 0.0
        %384 = vmatpush1.msra.mxu0 0.0
        %385 = vmatprep.mubr.f32.mxu0 0.0
        %386 = vmatmul.mubr.f32.gmra.mrb[0].mxu0 %v297
        %v387 = vpop.f32.mrb[0].mxu0
        %v388 = vadd.f32 %v319, %v387
        %v389 = vpop.f32.mrb[0].mxu0
        %390 = vdwg.mxu0
        %v391 = vmax.f32 %v388, 0.0
        %v392 = vld [vmem:[#allocation2] sm:$0xff]
        %v393 = vld [vmem:[#allocation6] sm:$0xff]
        %v394 = vld [vmem:[#allocation6 + $0x8] sm:$0xff]
        %v395 = vld [vmem:[#allocation6 + $0x10] sm:$0xff]
        %v396 = vld [vmem:[#allocation6 + $0x18] sm:$0xff]
        %v397 = vld [vmem:[#allocation6 + $0x20] sm:$0xff]
        %v398 = vld [vmem:[#allocation6 + $0x28] sm:$0xff]
        %v399 = vld [vmem:[#allocation6 + $0x30] sm:$0xff]
        %v400 = vld [vmem:[#allocation6 + $0x38] sm:$0xff]
        %v401 = vld [vmem:[#allocation6 + $0x40] sm:$0xff]
        %v402 = vld [vmem:[#allocation6 + $0x48] sm:$0xff]
        %v403 = vld [vmem:[#allocation6 + $0x50] sm:$0xff]
        %v404 = vld [vmem:[#allocation6 + $0x58] sm:$0xff]
        %v405 = vld [vmem:[#allocation6 + $0x60] sm:$0xff]
        %v406 = vld [vmem:[#allocation6 + $0x68] sm:$0xff]
        %v407 = vld [vmem:[#allocation6 + $0x70] sm:$0xff]
        %v408 = vld [vmem:[#allocation6 + $0x78] sm:$0xff]
        %409 = vmatprep.subr.mxu0 0.0
        %410 = vmatpush1.msra.mxu0 %v393
        %411 = vmatprep.subr.mxu0 0.0
        %412 = vmatpush1.msra.mxu0 %v394
        %413 = vmatprep.subr.mxu0 0.0
        %414 = vmatpush1.msra.mxu0 %v395
        %415 = vmatprep.subr.mxu0 0.0
        %416 = vmatpush1.msra.mxu0 %v396
        %417 = vmatprep.subr.mxu0 0.0
        %418 = vmatpush1.msra.mxu0 %v397
        %419 = vmatprep.subr.mxu0 0.0
        %420 = vmatpush1.msra.mxu0 %v398
        %421 = vmatprep.subr.mxu0 0.0
        %422 = vmatpush1.msra.mxu0 %v399
        %423 = vmatprep.subr.mxu0 0.0
        %424 = vmatpush1.msra.mxu0 %v400
        %425 = vmatprep.subr.mxu0 0.0
        %426 = vmatpush1.msra.mxu0 %v401
        %427 = vmatprep.subr.mxu0 0.0
        %428 = vmatpush1.msra.mxu0 %v402
        %429 = vmatprep.subr.mxu0 0.0
        %430 = vmatpush1.msra.mxu0 %v403
        %431 = vmatprep.subr.mxu0 0.0
        %432 = vmatpush1.msra.mxu0 %v404
        %433 = vmatprep.subr.mxu0 0.0
        %434 = vmatpush1.msra.mxu0 %v405
        %435 = vmatprep.subr.mxu0 0.0
        %436 = vmatpush1.msra.mxu0 %v406
        %437 = vmatprep.subr.mxu0 0.0
        %438 = vmatpush1.msra.mxu0 %v407
        %439 = vmatprep.subr.mxu0 0.0
        %440 = vmatpush1.msra.mxu0 %v408
        %441 = vmatprep.subr.mxu0 0.0
        %442 = vmatpush1.msra.mxu0 0.0
        %443 = vmatprep.subr.mxu0 0.0
        %444 = vmatpush1.msra.mxu0 0.0
        %445 = vmatprep.subr.mxu0 0.0
        %446 = vmatpush1.msra.mxu0 0.0
        %447 = vmatprep.subr.mxu0 0.0
        %448 = vmatpush1.msra.mxu0 0.0
        %449 = vmatprep.subr.mxu0 0.0
        %450 = vmatpush1.msra.mxu0 0.0
        %451 = vmatprep.subr.mxu0 0.0
        %452 = vmatpush1.msra.mxu0 0.0
        %453 = vmatprep.subr.mxu0 0.0
        %454 = vmatpush1.msra.mxu0 0.0
        %455 = vmatprep.subr.mxu0 0.0
        %456 = vmatpush1.msra.mxu0 0.0
        %457 = vmatprep.subr.mxu0 0.0
        %458 = vmatpush1.msra.mxu0 0.0
        %459 = vmatprep.subr.mxu0 0.0
        %460 = vmatpush1.msra.mxu0 0.0
        %461 = vmatprep.subr.mxu0 0.0
        %462 = vmatpush1.msra.mxu0 0.0
        %463 = vmatprep.subr.mxu0 0.0
        %464 = vmatpush1.msra.mxu0 0.0
        %465 = vmatprep.subr.mxu0 0.0
        %466 = vmatpush1.msra.mxu0 0.0
        %467 = vmatprep.subr.mxu0 0.0
        %468 = vmatpush1.msra.mxu0 0.0
        %469 = vmatprep.subr.mxu0 0.0
        %470 = vmatpush1.msra.mxu0 0.0
        %471 = vmatprep.subr.mxu0 0.0
        %472 = vmatpush1.msra.mxu0 0.0
        %473 = vmatprep.mubr.f32.mxu0 0.0
        %474 = vmatmul.mubr.f32.gmra.mrb[0].mxu0 %v391
        %v475 = vpop.f32.mrb[0].mxu0
        %v476 = vadd.f32 0.0, %v475
        %v477 = vpop.f32.mrb[0].mxu0
        %478 = vdwg.mxu0
        %v479 = vadd.f32 %v392, %v476
        %480 = vst [vmem:[#allocation2] sm:$0xff] %v479
        // Predicated region
        $region53: #{single_shot_attention.1} parent=39 // pred_check
          %p481 = pneg %p292
        $region54: #{single_shot_attention.1} parent=39 // pred_check_branch
          %483 = sbr.rel (%p481) target = $region56
        $region55: #{single_shot_attention.1} parent=39 // pred_region
          %v484 = vld [vmem:[#allocation2] sm:$0xff]
          %v485 = vld [vmem:[%s4] sm:$0x1]
          %v487 = vlaneseq
          %v488 = vshrl.u32 %v487, 7
          %v489 = vsub.s32 0, %v488
          %v490 = vrot.slane %v485, %v489
          %v492 = vadd.f32 %v484, %v490
          %v493 = vld [vmem:[%s287] sm:$0xff]
          %v494 = vxor.u32 %v492, 2147483648
          %v495 = vmul.f32 %v494, 1.442695
          %v496 = vpow.pop %v495
          %v497 = vadd.f32 %v496, 1.0
          %v498 = vrcp.pop %v497
          %v499 = vmul.f32 1.0, %v498
          %v500 = vmul.f32 %v493, %v499
          %501 = vst [vmem:[%s283] sm:$0xff] %v500
        $region56: #{single_shot_attention.1} parent=39 // pred_fallthru
          _
        %s502 = sand.u32 %s166, 1
        %s503 = scalar_lea.sflag [#allocation5], %s502
        %s504 = sand.u32 %s166, 1
        %s505 = smul.addr %s504, 8
        %s506 = scalar_lea.vmem [#allocation8], %s505
        // Predicated region
        $region57: #{single_shot_attention.1} parent=39 // pred_check
          %p507 = pneg %p176
        $region58: #{single_shot_attention.1} parent=39 // pred_check_branch
          %509 = sbr.rel (%p507) target = $region60
        $region59: #{single_shot_attention.1} parent=39 // pred_region
          %s511 = ssub.s32 128, 128
          %512 = vsyncadd %s503, %s511
          %s513 = smul.addr %s25, 128
          %s514 = scalar_lea.hbm %s5, %s513
          %s516 = sshll.u32 %s506, 4
          %s517 = int_to_ptr.vmem [resolvable:$true] %s516
          %519 = dma.vmem_to_hbm [thread:$0]  %s517, 128, %s514, %s503
        $region60: #{single_shot_attention.1} parent=39 // pred_fallthru
          _
      $region40: #{single_shot_attention.1} parent=5 // pred_fallthru
        _
      %p520 = scmp.le.s32.totalorder 2, %s16
      // Predicated region
      $region61: #{single_shot_attention.1} parent=5 // pred_check
        %p521 = pneg %p520
      $region62: #{single_shot_attention.1} parent=5 // pred_check_branch
        %523 = sbr.rel (%p521) target = $region64
      $region63: #{single_shot_attention.1} parent=5 // pred_region
        %s524 = ssub.s32 %s16, 2
        // Predicated region
        $region65: #{single_shot_attention.1} parent=63 // pred_check
          %p525 = pneg %p182
        $region66: #{single_shot_attention.1} parent=63 // pred_check_branch
          %527 = sbr.rel (%p525) target = $region68
        $region67: #{single_shot_attention.1} parent=63 // pred_region
          %s528 = sand.u32 %s167, 1
          %s529 = scalar_lea.sflag [#allocation5], %s528
          %s530 = sand.u32 %s167, 1
          %s531 = smul.addr %s530, 8
          %s532 = scalar_lea.vmem [#allocation8], %s531
          %533 = dma.done %s529, 128
        $region68: #{single_shot_attention.1} parent=63 // pred_fallthru
          _
      $region64: #{single_shot_attention.1} parent=5 // pred_fallthru
        _
    $region6: #{single_shot_attention.1} parent=1 // loop_footer
      %s20 = sadd.s32 1, %s16
    $region7: #{single_shot_attention.1} parent=1 // loop_footer_branch
      %15 = sbr.rel target = $region3
    $region8: #{single_shot_attention.1} parent=1 // loop_exit
      _
    %534 = vsyncpa [#allocation4], 1
    %s535 = scalar_lea.sflag [#allocation4], 1
    %536 = vsyncpa %s535, 1
    %537 = vsyncpa [#allocation7], 1
    %538 = vsyncpa [#allocation5], 1
    %s539 = scalar_lea.sflag [#allocation5], 1
    %540 = vsyncpa %s539, 1

</llo_original>
